<compile_context>
chip_gen: v5e
topology: v5e:2x2
jax: 0.10.0
libtpu: 0.0.40
codegen_flags: <defaults>
</compile_context>

<pallas_src>
import functools
import math

import jax
import jax.numpy as jnp
import numpy as np
from jax.experimental import pallas as pl
from jax.experimental.pallas import tpu as pltpu


def syngcn_sum_mean_kernel(src_ref, neigh_ref, out_ref, mask_ref, *,
                           n_src, n_neigh, feat_dim):
    """One tile of rows (rows on sublanes, S/M token slots folded into lanes).

    src_ref   : (TR, n_src  * D)  source token features (native dtype)
    neigh_ref : (TR, n_neigh* D)  neighbor features (native dtype)
    out_ref   : (TR, D)           hidden = src.sum(S) + neigh.sum(M)/clamp(count,1)
    mask_ref  : (TR, 1)           1.0 where the hidden row has any nonzero element
    """
    D = feat_dim

    # src.sum(dim=2): unrolled static lane-window accumulation (S is tiny).
    src_sum = src_ref[:, 0:D].astype(jnp.float32)
    for s in range(1, n_src):
        src_sum = src_sum + src_ref[:, s * D:(s + 1) * D].astype(jnp.float32)

    # neigh.sum(dim=2) and neighbor_num (count of non-all-zero neighbor slots).
    x = neigh_ref[:, 0:D].astype(jnp.float32)
    neigh_sum = x
    num = (jnp.max(jnp.abs(x), axis=-1, keepdims=True) > 0.0).astype(jnp.float32)
    for m in range(1, n_neigh):
        x = neigh_ref[:, m * D:(m + 1) * D].astype(jnp.float32)
        neigh_sum = neigh_sum + x
        num = num + (jnp.max(jnp.abs(x), axis=-1, keepdims=True) > 0.0).astype(jnp.float32)

    inv = pl.reciprocal(jnp.maximum(num, 1.0))      # exact (approx=False), keeps 1e-5 tol
    hidden = src_sum + neigh_sum * inv              # (TR, D) f32 accumulation

    out_ref[...] = hidden.astype(out_ref.dtype)

    # Row filter mask (any nonzero element), computed in-kernel so the filter step
    # outside does not need a second full pass over hidden.
    nz = jnp.max(jnp.abs(hidden), axis=-1, keepdims=True) > 0.0
    mask_ref[...] = nz.astype(jnp.float32)
    # TODO(synk): for production D < 128, pack k = 128 // D node rows per 128-lane
    # group (lane-dense hidden/mask stores + segmented lane reduce for the neighbor
    # count); kept unpacked here to stay on well-trodden lowering paths.


def _round_up(x, m):
    return (x + m - 1) // m * m


def _chip_profile():
    """Return (multi_tensorcore, vmem_budget_bytes, vmem_limit_bytes), conservatively."""
    kind = ""
    try:
        kind = jax.devices()[0].device_kind.lower()
    except Exception:
        pass
    single_tc = any(t in kind for t in ("v5 lite", "v5e", "v6 lite", "v6e"))
    if single_tc:
        # 128 MiB physical VMEM, one TensorCore: one big tile, generous budget.
        return False, 48 * 1024 * 1024, 64 * 1024 * 1024
    # v7x (64 MiB VMEM, 2 TCs), v4/v5p megacore, or unknown: stay conservative.
    return True, 24 * 1024 * 1024, 32 * 1024 * 1024


def _choose_row_tile(R, S, M, D, in_itemsize, out_itemsize, vmem_budget_bytes, multi_tc):
    """Largest row tile (multiple of 8, or the full row extent) fitting the budget."""
    LANE = 128
    d_pad = _round_up(D, LANE)
    src_lanes = _round_up(S * D, LANE)
    neigh_lanes = _round_up(M * D, LANE)
    per_row = (
        2 * (src_lanes + neigh_lanes) * in_itemsize   # double-buffered input blocks
        + 2 * d_pad * out_itemsize                    # double-buffered hidden block
        + 2 * LANE * 4                                # double-buffered lane-padded mask block
        + 4 * d_pad * 4                               # live f32 accumulators / spill headroom
    )
    tile = (vmem_budget_bytes // max(per_row, 1)) // 8 * 8
    tile = max(8, min(tile, 1024))                    # diminishing returns past ~1024 rows
    if multi_tc:
        # Keep >= ~4 grid steps so the "parallel" axis shards across both TensorCores.
        tile = min(tile, max(8, _round_up(pl.cdiv(R, 4), 8)))
    if tile >= R:
        tile = R                                      # single full-extent block (always legal)
    return tile


def syngcn_forward(src_node_features, neigh_node_features, *, row_tile=None,
                   out_dtype=None, vmem_budget_bytes=None, vmem_limit_bytes=None):
    """SynGCNLayer.forward for agg_neighbor_method='mean', agg_hidden_method='sum'."""
    B, N, S, D = src_node_features.shape
    Bn, Nn, M, Dn = neigh_node_features.shape
    assert (B, N, D) == (Bn, Nn, Dn)
    R = B * N
    if out_dtype is None:
        out_dtype = src_node_features.dtype          # f32 in -> f32 out (torch parity)

    multi_tc, budget_default, limit_default = _chip_profile()
    if vmem_budget_bytes is None:
        vmem_budget_bytes = budget_default
    if vmem_limit_bytes is None:
        vmem_limit_bytes = limit_default

    in_itemsize = jnp.dtype(src_node_features.dtype).itemsize
    out_itemsize = jnp.dtype(out_dtype).itemsize
    if row_tile is None:
        row_tile = _choose_row_tile(R, S, M, D, in_itemsize, out_itemsize,
                                    vmem_budget_bytes, multi_tc)

    # Free, no-copy reshapes: rows on sublanes, the short S/M token axes folded
    # into lanes.  No transpose, no pad; inputs stay in their native dtype.
    src2d = src_node_features.reshape(R, S * D)
    neigh2d = neigh_node_features.reshape(R, M * D)

    kernel = functools.partial(syngcn_sum_mean_kernel,
                               n_src=S, n_neigh=M, feat_dim=D)

    hidden_full, mask_col = pl.pallas_call(
        kernel,
        out_shape=(
            jax.ShapeDtypeStruct((R, D), out_dtype),
            jax.ShapeDtypeStruct((R, 1), jnp.float32),
        ),
        grid_spec=pltpu.PrefetchScalarGridSpec(
            num_scalar_prefetch=0,
            grid=(pl.cdiv(R, row_tile),),             # ragged last block, no pad
            in_specs=[
                pl.BlockSpec((row_tile, S * D), lambda i: (i, 0)),
                pl.BlockSpec((row_tile, M * D), lambda i: (i, 0)),
            ],
            out_specs=[
                pl.BlockSpec((row_tile, D), lambda i: (i, 0)),
                pl.BlockSpec((row_tile, 1), lambda i: (i, 0)),
            ],
        ),
        compiler_params=pltpu.CompilerParams(
            dimension_semantics=("parallel",),
            vmem_limit_bytes=vmem_limit_bytes,
        ),
    )(src2d, neigh2d)

    mask = mask_col[:, 0] > 0.0

    # filter_nonsource_nodes: drop rows that are all zeros.
    # Dynamic output shape -> plain JAX glue outside the kernel (outside jit).
    idx = jnp.nonzero(mask)[0]
    return hidden_full[idx]


def init_params(input_dim, hidden_dim, key):
    """Deterministic kaiming-uniform-style init, mirroring the module's __init__.
    (These parameters are unused by forward() in the default 'mean'+'sum' config.)"""
    k1, k2, k3, k4 = jax.random.split(key, 4)

    def kaiming_uniform(k, shape, fan_in):
        bound = math.sqrt(6.0 / fan_in)
        return jax.random.uniform(k, shape, jnp.float32, -bound, bound)

    return {
        "aggregator.weight": kaiming_uniform(k1, (input_dim, hidden_dim), input_dim),
        "aggregator.bias": jnp.zeros((hidden_dim,), jnp.float32),
        "weight": kaiming_uniform(k2, (input_dim, hidden_dim), input_dim),
        "hidden_map.weight": kaiming_uniform(k3, (hidden_dim, hidden_dim * 2), hidden_dim * 2),
        "hidden_map.bias": kaiming_uniform(k4, (hidden_dim,), hidden_dim * 2),
    }
    # TODO(synk): 'pooling' / 'lstm' aggregation and the 'concat' hidden path
    # (hidden_map + leaky_relu) are not exercised by the default config and are
    # not implemented here.


def reference_forward(src, neigh):
    """Pure-jnp reference mirroring the PyTorch forward (mean + sum)."""
    src = src.astype(jnp.float32)
    neigh = neigh.astype(jnp.float32)
    neighbor_num = jnp.sum(~jnp.all(neigh == 0, axis=-1), axis=-1)          # (B, N)
    agg = neigh.sum(axis=2) / jnp.clip(neighbor_num, 1)[..., None]          # (B, N, D)
    hidden = src.sum(axis=2) + agg                                          # (B, N, D)
    hidden = hidden.reshape(-1, hidden.shape[-1])
    keep = jnp.nonzero(jnp.sum(hidden != 0, axis=1) > 0)[0]
    return hidden[keep]


if __name__ == "__main__":
    key = jax.random.PRNGKey(0)
    B, N, S, M = 2, 8, 3, 4          # batch, src_node_num, tokens-per-node, max neighbors
    input_dim = hidden_dim = 32

    k1, k2, k3, k4 = jax.random.split(key, 4)
    src = jax.random.normal(k1, (B, N, S, input_dim), jnp.float32)
    neigh = jax.random.normal(k2, (B, N, M, input_dim), jnp.float32)

    # Zero-pad some neighbor slots (ragged neighbor lists) and make the last two
    # source nodes of each batch empty (non-source rows to be filtered).
    neigh_valid = jax.random.bernoulli(k3, 0.7, (B, N, M, 1)).astype(jnp.float32)
    neigh = neigh * neigh_valid
    node_valid = jnp.concatenate(
        [jnp.ones((B, N - 2, 1, 1), jnp.float32), jnp.zeros((B, 2, 1, 1), jnp.float32)],
        axis=1,
    )
    src = src * node_valid
    neigh = neigh * node_valid

    params = init_params(input_dim, hidden_dim, k4)  # unused in default forward

    out = syngcn_forward(src, neigh)
    jax.block_until_ready(out)

    ref = reference_forward(src, neigh)
    np.testing.assert_allclose(np.asarray(out), np.asarray(ref), rtol=1e-5, atol=1e-5)

    print("KERNEL_OK")
</pallas_src>

<mosaic_0001>
module attributes {stable_mosaic.version = 11 : i64} {
  func.func @syngcn_sum_mean_kernel(%arg0: i32, %arg1: memref<8x96xf32, #tpu.memory_space<vmem>>, %arg2: memref<8x128xf32, #tpu.memory_space<vmem>>, %arg3: memref<8x32xf32, #tpu.memory_space<vmem>>, %arg4: memref<8x1xf32, #tpu.memory_space<vmem>>) attributes {dimension_semantics = [#tpu.dimension_semantics<parallel>], iteration_bounds = array<i64: 2>, scalar_prefetch = 0 : i64, scratch_operands = 0 : i64, tpu.core_type = #tpu.core_type<tc>, window_params = [{transform_indices = @transform_0, window_bounds = array<i64: 8, 96>}, {transform_indices = @transform_1, window_bounds = array<i64: 8, 128>}, {transform_indices = @transform_2, window_bounds = array<i64: 8, 32>}, {transform_indices = @transform_3, window_bounds = array<i64: 8, 1>}]} {
    %c0 = arith.constant 0 : index
    %c0_0 = arith.constant 0 : index
    %0 = vector.load %arg1[%c0, %c0_0] : memref<8x96xf32, #tpu.memory_space<vmem>>, vector<8x32xf32>
    %c0_1 = arith.constant 0 : index
    %c32 = arith.constant 32 : index
    %1 = vector.load %arg1[%c0_1, %c32] : memref<8x96xf32, #tpu.memory_space<vmem>>, vector<8x32xf32>
    %2 = arith.addf %0, %1 : vector<8x32xf32>
    %c0_2 = arith.constant 0 : index
    %c64 = arith.constant 64 : index
    %3 = vector.load %arg1[%c0_2, %c64] : memref<8x96xf32, #tpu.memory_space<vmem>>, vector<8x32xf32>
    %4 = arith.addf %2, %3 : vector<8x32xf32>
    %c0_3 = arith.constant 0 : index
    %c0_4 = arith.constant 0 : index
    %5 = vector.load %arg2[%c0_3, %c0_4] : memref<8x128xf32, #tpu.memory_space<vmem>>, vector<8x32xf32>
    %6 = math.absf %5 : vector<8x32xf32>
    %cst = arith.constant dense<0xFF800000> : vector<8xf32>
    %7 = vector.multi_reduction <maximumf>, %6, %cst [1] : vector<8x32xf32> to vector<8xf32>
    %8 = vector.shape_cast %7 : vector<8xf32> to vector<8x1xf32>
    %cst_5 = arith.constant 0.000000e+00 : f32
    %9 = vector.broadcast %cst_5 : f32 to vector<8x1xf32>
    %10 = arith.cmpf ogt, %8, %9 : vector<8x1xf32>
    %11 = arith.extui %10 : vector<8x1xi1> to vector<8x1xi32>
    %12 = arith.sitofp %11 : vector<8x1xi32> to vector<8x1xf32>
    %c0_6 = arith.constant 0 : index
    %c32_7 = arith.constant 32 : index
    %13 = vector.load %arg2[%c0_6, %c32_7] : memref<8x128xf32, #tpu.memory_space<vmem>>, vector<8x32xf32>
    %14 = arith.addf %5, %13 : vector<8x32xf32>
    %15 = math.absf %13 : vector<8x32xf32>
    %cst_8 = arith.constant dense<0xFF800000> : vector<8xf32>
    %16 = vector.multi_reduction <maximumf>, %15, %cst_8 [1] : vector<8x32xf32> to vector<8xf32>
    %17 = vector.shape_cast %16 : vector<8xf32> to vector<8x1xf32>
    %cst_9 = arith.constant 0.000000e+00 : f32
    %18 = vector.broadcast %cst_9 : f32 to vector<8x1xf32>
    %19 = arith.cmpf ogt, %17, %18 : vector<8x1xf32>
    %20 = arith.extui %19 : vector<8x1xi1> to vector<8x1xi32>
    %21 = arith.sitofp %20 : vector<8x1xi32> to vector<8x1xf32>
    %22 = arith.addf %12, %21 : vector<8x1xf32>
    %c0_10 = arith.constant 0 : index
    %c64_11 = arith.constant 64 : index
    %23 = vector.load %arg2[%c0_10, %c64_11] : memref<8x128xf32, #tpu.memory_space<vmem>>, vector<8x32xf32>
    %24 = arith.addf %14, %23 : vector<8x32xf32>
    %25 = math.absf %23 : vector<8x32xf32>
    %cst_12 = arith.constant dense<0xFF800000> : vector<8xf32>
    %26 = vector.multi_reduction <maximumf>, %25, %cst_12 [1] : vector<8x32xf32> to vector<8xf32>
    %27 = vector.shape_cast %26 : vector<8xf32> to vector<8x1xf32>
    %cst_13 = arith.constant 0.000000e+00 : f32
    %28 = vector.broadcast %cst_13 : f32 to vector<8x1xf32>
    %29 = arith.cmpf ogt, %27, %28 : vector<8x1xf32>
    %30 = arith.extui %29 : vector<8x1xi1> to vector<8x1xi32>
    %31 = arith.sitofp %30 : vector<8x1xi32> to vector<8x1xf32>
    %32 = arith.addf %22, %31 : vector<8x1xf32>
    %c0_14 = arith.constant 0 : index
    %c96 = arith.constant 96 : index
    %33 = vector.load %arg2[%c0_14, %c96] : memref<8x128xf32, #tpu.memory_space<vmem>>, vector<8x32xf32>
    %34 = arith.addf %24, %33 : vector<8x32xf32>
    %35 = math.absf %33 : vector<8x32xf32>
    %cst_15 = arith.constant dense<0xFF800000> : vector<8xf32>
    %36 = vector.multi_reduction <maximumf>, %35, %cst_15 [1] : vector<8x32xf32> to vector<8xf32>
    %37 = vector.shape_cast %36 : vector<8xf32> to vector<8x1xf32>
    %cst_16 = arith.constant 0.000000e+00 : f32
    %38 = vector.broadcast %cst_16 : f32 to vector<8x1xf32>
    %39 = arith.cmpf ogt, %37, %38 : vector<8x1xf32>
    %40 = arith.extui %39 : vector<8x1xi1> to vector<8x1xi32>
    %41 = arith.sitofp %40 : vector<8x1xi32> to vector<8x1xf32>
    %42 = arith.addf %32, %41 : vector<8x1xf32>
    %cst_17 = arith.constant 1.000000e+00 : f32
    %43 = vector.broadcast %cst_17 : f32 to vector<8x1xf32>
    %44 = arith.maximumf %42, %43 : vector<8x1xf32>
    %45 = tpu.reciprocal %44 : vector<8x1xf32> -> vector<8x1xf32>
    %46 = vector.broadcast %45 : vector<8x1xf32> to vector<8x32xf32>
    %47 = arith.mulf %34, %46 : vector<8x32xf32>
    %48 = arith.addf %4, %47 : vector<8x32xf32>
    %c0_18 = arith.constant 0 : index
    %c0_19 = arith.constant 0 : index
    %49 = vector.load %arg3[%c0_18, %c0_19] : memref<8x32xf32, #tpu.memory_space<vmem>>, vector<8x32xf32>
    tpu.vector_store %arg3[%c0_18, %c0_19], %48 {strides = array<i32>} : memref<8x32xf32, #tpu.memory_space<vmem>>, vector<8x32xf32>,
    %50 = math.absf %48 : vector<8x32xf32>
    %cst_20 = arith.constant dense<0xFF800000> : vector<8xf32>
    %51 = vector.multi_reduction <maximumf>, %50, %cst_20 [1] : vector<8x32xf32> to vector<8xf32>
    %52 = vector.shape_cast %51 : vector<8xf32> to vector<8x1xf32>
    %cst_21 = arith.constant 0.000000e+00 : f32
    %53 = vector.broadcast %cst_21 : f32 to vector<8x1xf32>
    %54 = arith.cmpf ogt, %52, %53 : vector<8x1xf32>
    %55 = arith.extui %54 : vector<8x1xi1> to vector<8x1xi32>
    %56 = arith.sitofp %55 : vector<8x1xi32> to vector<8x1xf32>
    %c0_22 = arith.constant 0 : index
    %c0_23 = arith.constant 0 : index
    %57 = vector.load %arg4[%c0_22, %c0_23] : memref<8x1xf32, #tpu.memory_space<vmem>>, vector<8x1xf32>
    tpu.vector_store %arg4[%c0_22, %c0_23], %56 {strides = array<i32>} : memref<8x1xf32, #tpu.memory_space<vmem>>, vector<8x1xf32>,
    return
  }
  func.func @transform_0(%arg0: i32) -> (i32, i32) {
    %c0_i32 = arith.constant 0 : i32
    %c0_i32_0 = arith.constant 0 : i32
    return %arg0, %c0_i32 : i32, i32
  }
  func.func @transform_1(%arg0: i32) -> (i32, i32) {
    %c0_i32 = arith.constant 0 : i32
    %c0_i32_0 = arith.constant 0 : i32
    return %arg0, %c0_i32 : i32, i32
  }
  func.func @transform_2(%arg0: i32) -> (i32, i32) {
    %c0_i32 = arith.constant 0 : i32
    %c0_i32_0 = arith.constant 0 : i32
    return %arg0, %c0_i32 : i32, i32
  }
  func.func @transform_3(%arg0: i32) -> (i32, i32) {
    %c0_i32 = arith.constant 0 : i32
    %c0_i32_0 = arith.constant 0 : i32
    return %arg0, %c0_i32 : i32, i32
  }
}

</mosaic_0001>

<llo_original>
// kernel: tpu_custom_call.1
$region0: #{tpu_custom_call.1}
  #allocation0 [shape = 'u32[]', space=smem, size = 0x4, offset = 0x4, fixed_abs, tag = 'smem constant byte address 0x4 - core index']
  #allocation1 [shape = 'u32[72,128]{1,0:T(1,128)}', space=vmem, size = 0x9000, scoped, tag = 'internal scratch']
  %s0 = inlined_call_operand.hbm [shape: f32[16,96], index: 0, kind: input, shape index: {}]
  %s1 = inlined_call_operand.hbm [shape: f32[16,128], index: 1, kind: input, shape index: {}]
  %s2 = inlined_call_operand.hbm [shape: f32[16,32], index: 2, kind: output, shape index: {0}]
  %s3 = inlined_call_operand.vmem [shape: f32[16,1], index: 3, kind: output, shape index: {1}]
  %4 = xla_tuple %s2, %s3
  %s5 = sld [smem:[#allocation0]]
  $region57: #{tpu_custom_call.1} parent=0
    _
  %s7 = ssub.s32 1, %s5
  %s8 = scalar_select 0, %s7, %s5
  $region1: #{tpu_custom_call.1} parent=0
    #allocation2 [shape = 'u8[8192]{0}', space=vmem, size = 0x2000, scoped, tag = 'input window, operand 0']
    #allocation3 [shape = 's32[2]{0}', space=sflag, size = 0x8, scoped, tag = 'scoped memory for tpu_custom_call.1']
    #allocation4 [shape = 's32[2]{0}', space=sflag, size = 0x8, scoped, tag = 'scoped memory for tpu_custom_call.1']
    #allocation5 [shape = 'u8[8192]{0}', space=vmem, size = 0x2000, scoped, tag = 'input window, operand 1']
    #allocation6 [shape = 's32[2]{0}', space=sflag, size = 0x8, scoped, tag = 'scoped memory for tpu_custom_call.1']
    #allocation7 [shape = 'u8[8192]{0}', space=vmem, size = 0x2000, scoped, tag = 'output window, operand 0']
    %9 = vsyncpa [#allocation3], 0
    %s10 = scalar_lea.sflag [#allocation3], 1
    %11 = vsyncpa %s10, 0
    %12 = vsyncpa [#allocation6], 0
    %s13 = scalar_lea.sflag [#allocation6], 1
    %14 = vsyncpa %s13, 0
    %15 = vsyncpa [#allocation4], 0
    %s16 = scalar_lea.sflag [#allocation4], 1
    %17 = vsyncpa %s16, 0
    loop: start=0, step=1, limit=4
    $region2: #{tpu_custom_call.1} parent=1 // loop_pre_header
      _
    $region3: #{tpu_custom_call.1} parent=1 // loop_header
      %s19 = sphi 0, %s23
      %p20 = scmp.ge.s32.totalorder %s19, 4
      %s29 = sphi 0, %s31
      %s32 = sphi 0, %s29
      %s33 = sphi 0, %s32
      %s49 = sphi 0, %s33
      %s55 = sphi 0, %s57
      %s58 = sphi 0, %s55
      %s59 = sphi 0, %s58
      %s75 = sphi 0, %s59
      %s81 = sphi 0, %s83
      %s84 = sphi 0, %s81
      %s85 = sphi 0, %s84
      %s101 = sphi 0, %s85
      %s107 = sphi 0, %s109
      %s110 = sphi 0, %s107
      %s111 = sphi 0, %s110
      %s127 = sphi 0, %s111
    $region4: #{tpu_custom_call.1} parent=1 // loop_header_branch
      %22 = sbr.rel (%p20) target = $region8
    $region5: #{tpu_custom_call.1} parent=1 // loop_body
      %s24 = ssub.s32 %s19, 1
      %s25 = ssub.s32 %s19, 2
      %s26 = sadd.s32 %s19, 1
      %s27 = ssub.s32 %s19, %s26
      %p28 = scmp.eq.s32.totalorder %s27, 0
      %s30 = sadd.s32 %s29, 1
      %s31 = scalar_select %p28, %s29, %s30
      %p34 = pneg %p28
      %p35 = scmp.eq.s32.totalorder %s19, 1
      %p36 = por %p34, %p35
      %p37 = scmp.ne.s32.totalorder %s29, %s32
      %p38 = scmp.eq.s32.totalorder %s19, 0
      %p39 = por %p37, %p38
      %p40 = scmp.ne.s32.totalorder %s29, %s32
      %p41 = scmp.eq.s32.totalorder %s24, 1
      %p42 = por %p40, %p41
      %p43 = scmp.ne.s32.totalorder %s32, %s33
      %p44 = scmp.eq.s32.totalorder %s24, 0
      %p45 = por %p43, %p44
      %p46 = scmp.ne.s32.totalorder %s32, %s33
      %p47 = scmp.eq.s32.totalorder %s25, 1
      %p48 = por %p46, %p47
      %p50 = scmp.ne.s32.totalorder %s33, %s49
      %p51 = scmp.eq.s32.totalorder %s25, 0
      %p52 = por %p50, %p51
      %s53 = ssub.s32 %s19, %s26
      %p54 = scmp.eq.s32.totalorder %s53, 0
      %s56 = sadd.s32 %s55, 1
      %s57 = scalar_select %p54, %s55, %s56
      %p60 = pneg %p54
      %p61 = scmp.eq.s32.totalorder %s19, 1
      %p62 = por %p60, %p61
      %p63 = scmp.ne.s32.totalorder %s55, %s58
      %p64 = scmp.eq.s32.totalorder %s19, 0
      %p65 = por %p63, %p64
      %p66 = scmp.ne.s32.totalorder %s55, %s58
      %p67 = scmp.eq.s32.totalorder %s24, 1
      %p68 = por %p66, %p67
      %p69 = scmp.ne.s32.totalorder %s58, %s59
      %p70 = scmp.eq.s32.totalorder %s24, 0
      %p71 = por %p69, %p70
      %p72 = scmp.ne.s32.totalorder %s58, %s59
      %p73 = scmp.eq.s32.totalorder %s25, 1
      %p74 = por %p72, %p73
      %p76 = scmp.ne.s32.totalorder %s59, %s75
      %p77 = scmp.eq.s32.totalorder %s25, 0
      %p78 = por %p76, %p77
      %s79 = ssub.s32 %s19, %s26
      %p80 = scmp.eq.s32.totalorder %s79, 0
      %s82 = sadd.s32 %s81, 1
      %s83 = scalar_select %p80, %s81, %s82
      %p86 = pneg %p80
      %p87 = scmp.eq.s32.totalorder %s19, 1
      %p88 = por %p86, %p87
      %p89 = scmp.ne.s32.totalorder %s81, %s84
      %p90 = scmp.eq.s32.totalorder %s19, 0
      %p91 = por %p89, %p90
      %p92 = scmp.ne.s32.totalorder %s81, %s84
      %p93 = scmp.eq.s32.totalorder %s24, 1
      %p94 = por %p92, %p93
      %p95 = scmp.ne.s32.totalorder %s84, %s85
      %p96 = scmp.eq.s32.totalorder %s24, 0
      %p97 = por %p95, %p96
      %p98 = scmp.ne.s32.totalorder %s84, %s85
      %p99 = scmp.eq.s32.totalorder %s25, 1
      %p100 = por %p98, %p99
      %p102 = scmp.ne.s32.totalorder %s85, %s101
      %p103 = scmp.eq.s32.totalorder %s25, 0
      %p104 = por %p102, %p103
      %s105 = ssub.s32 %s19, %s26
      %p106 = scmp.eq.s32.totalorder %s105, 0
      %s108 = sadd.s32 %s107, 1
      %s109 = scalar_select %p106, %s107, %s108
      %p112 = pneg %p106
      %p113 = scmp.eq.s32.totalorder %s19, 1
      %p114 = por %p112, %p113
      %p115 = scmp.ne.s32.totalorder %s107, %s110
      %p116 = scmp.eq.s32.totalorder %s19, 0
      %p117 = por %p115, %p116
      %p118 = scmp.ne.s32.totalorder %s107, %s110
      %p119 = scmp.eq.s32.totalorder %s24, 1
      %p120 = por %p118, %p119
      %p121 = scmp.ne.s32.totalorder %s110, %s111
      %p122 = scmp.eq.s32.totalorder %s24, 0
      %p123 = por %p121, %p122
      %p124 = scmp.ne.s32.totalorder %s110, %s111
      %p125 = scmp.eq.s32.totalorder %s25, 1
      %p126 = por %p124, %p125
      %p128 = scmp.ne.s32.totalorder %s111, %s127
      %p129 = scmp.eq.s32.totalorder %s25, 0
      %p130 = por %p128, %p129
      %p131 = scmp.le.s32.totalorder 1, %s19
      %p132 = scmp.lt.s32.totalorder %s19, 3
      %p133 = pnand %p131, %p132
      %p134 = pneg %p133
      // Predicated region
      $region9: #{tpu_custom_call.1} parent=5 // pred_check
        _
      $region10: #{tpu_custom_call.1} parent=5 // pred_check_branch
        %136 = sbr.rel (%p133) target = $region12
      $region11: #{tpu_custom_call.1} parent=5 // pred_region
        %s137 = ssub.s32 %s19, 1
      $region12: #{tpu_custom_call.1} parent=5 // pred_fallthru
        _
      %p138 = scmp.lt.s32.totalorder %s19, 2
      // Predicated region
      $region13: #{tpu_custom_call.1} parent=5 // pred_check
        %p139 = pneg %p138
      $region14: #{tpu_custom_call.1} parent=5 // pred_check_branch
        %141 = sbr.rel (%p139) target = $region16
      $region15: #{tpu_custom_call.1} parent=5 // pred_region
        // Predicated region
        $region17: #{tpu_custom_call.1} parent=15 // pred_check
          %p142 = pneg %p39
        $region18: #{tpu_custom_call.1} parent=15 // pred_check_branch
          %144 = sbr.rel (%p142) target = $region20
        $region19: #{tpu_custom_call.1} parent=15 // pred_region
          %s145 = sand.u32 %s29, 1
          %s146 = scalar_lea.sflag [#allocation3], %s145
          %s147 = sand.u32 %s29, 1
          %s148 = smul.addr %s147, 8
          %s149 = scalar_lea.vmem [#allocation2], %s148
          %151 = vsyncadd %s146, 0
          %s152 = smul.addr %s19, 8
          %s153 = scalar_lea.hbm %s0, %s152
          %s155 = sshll.u32 %s153, 4
          %s156 = int_to_ptr.hbm [resolvable:$true] %s155
          %s157 = sshll.u32 %s149, 4
          %s158 = int_to_ptr.vmem [resolvable:$true] %s157
          %160 = dma.hbm_to_vmem [thread:$0]  %s156, 128, %s158, %s146
        $region20: #{tpu_custom_call.1} parent=15 // pred_fallthru
          _
        // Predicated region
        $region21: #{tpu_custom_call.1} parent=15 // pred_check
          %p161 = pneg %p65
        $region22: #{tpu_custom_call.1} parent=15 // pred_check_branch
          %163 = sbr.rel (%p161) target = $region24
        $region23: #{tpu_custom_call.1} parent=15 // pred_region
          %s164 = sand.u32 %s55, 1
          %s165 = scalar_lea.sflag [#allocation6], %s164
          %s166 = sand.u32 %s55, 1
          %s167 = smul.addr %s166, 8
          %s168 = scalar_lea.vmem [#allocation5], %s167
          %170 = vsyncadd %s165, 0
          %s171 = smul.addr %s19, 8
          %s172 = scalar_lea.hbm %s1, %s171
          %s174 = sshll.u32 %s172, 4
          %s175 = int_to_ptr.hbm [resolvable:$true] %s174
          %s176 = sshll.u32 %s168, 4
          %s177 = int_to_ptr.vmem [resolvable:$true] %s176
          %179 = dma.hbm_to_vmem [thread:$0]  %s175, 128, %s177, %s165
        $region24: #{tpu_custom_call.1} parent=15 // pred_fallthru
          _
      $region16: #{tpu_custom_call.1} parent=5 // pred_fallthru
        _
      %p180 = scmp.le.s32.totalorder 1, %s19
      %p181 = scmp.lt.s32.totalorder %s19, 3
      %p182 = pnand %p180, %p181
      %p183 = pneg %p182
      // Predicated region
      $region25: #{tpu_custom_call.1} parent=5 // pred_check
        _
      $region26: #{tpu_custom_call.1} parent=5 // pred_check_branch
        %185 = sbr.rel (%p182) target = $region28
      $region27: #{tpu_custom_call.1} parent=5 // pred_region
        %s186 = ssub.s32 %s19, 1
        %s187 = sand.u32 %s32, 1
        %s188 = scalar_lea.sflag [#allocation3], %s187
        %s189 = sand.u32 %s32, 1
        %s190 = smul.addr %s189, 8
        %s191 = scalar_lea.vmem [#allocation2], %s190
        // Predicated region
        $region29: #{tpu_custom_call.1} parent=27 // pred_check
          %p192 = pneg %p45
        $region30: #{tpu_custom_call.1} parent=27 // pred_check_branch
          %194 = sbr.rel (%p192) target = $region32
        $region31: #{tpu_custom_call.1} parent=27 // pred_region
          %196 = dma.done %s188, 128
        $region32: #{tpu_custom_call.1} parent=27 // pred_fallthru
          _
        %s197 = sand.u32 %s58, 1
        %s198 = scalar_lea.sflag [#allocation6], %s197
        %s199 = sand.u32 %s58, 1
        %s200 = smul.addr %s199, 8
        %s201 = scalar_lea.vmem [#allocation5], %s200
        // Predicated region
        $region33: #{tpu_custom_call.1} parent=27 // pred_check
          %p202 = pneg %p71
        $region34: #{tpu_custom_call.1} parent=27 // pred_check_branch
          %204 = sbr.rel (%p202) target = $region36
        $region35: #{tpu_custom_call.1} parent=27 // pred_region
          %206 = dma.done %s198, 128
        $region36: #{tpu_custom_call.1} parent=27 // pred_fallthru
          _
        %s207 = sand.u32 %s32, 1
        %s208 = scalar_lea.sflag [#allocation3], %s207
        %s209 = sand.u32 %s32, 1
        %s210 = smul.addr %s209, 8
        %s211 = scalar_lea.vmem [#allocation2], %s210
        %p212 = pneg %p45
        %p213 = pneg %p42
        %s214 = sand.u32 %s58, 1
        %s215 = scalar_lea.sflag [#allocation6], %s214
        %s216 = sand.u32 %s58, 1
        %s217 = smul.addr %s216, 8
        %s218 = scalar_lea.vmem [#allocation5], %s217
        %p219 = pneg %p71
        %p220 = pneg %p68
        %p221 = pneg %p97
        %p222 = pneg %p94
        %s223 = sand.u32 %s84, 1
        %s224 = scalar_lea.sflag [#allocation4], %s223
        %s225 = sand.u32 %s84, 1
        %s226 = smul.addr %s225, 8
        %s227 = scalar_lea.vmem [#allocation7], %s226
        %p228 = pneg %p123
        %p229 = pneg %p120
        %p230 = scmp.lt.s32.totalorder %s24, 1
        %s231 = scalar_select %p230, %s24, 1
        %s232 = smul.addr %s231, 8
        %s233 = scalar_lea.vmem %s3, %s232
        %p234 = scmp.lt.s32.totalorder %s24, 1
        %s235 = scalar_select %p234, %s24, 1
        %s236 = smul.addr %s235, 8
        %s237 = scalar_lea.vmem %s3, %s236
        %v238 = vld [vmem:[%s191] sm:$0xff]
        %240 = vrot.lane.b32.xlu0 %v238, 96
        %v241 = vpop.permute.xlu0 %240
        %v243 = vadd.f32 %v238, %v241
        %244 = vrot.lane.b32.xlu0 %v238, 64
        %v245 = vpop.permute.xlu0 %244
        %v247 = vadd.f32 %v243, %v245
        %v248 = vld [vmem:[%s201] sm:$0xff]
        %v249 = vand.u32 2147483647, %v248
        %vm250 = vcmask 261120
        %v251 = vsel %vm250, %v249, -inf
        %252 = vmax.xlane.f32.xlu0 %v251
        %v253 = vpop.xlane.xlu0 %252
        %vm254 = vcmp.gt.f32.partialorder %v253, 0.0
        %v255 = vsel %vm254, 1, 0
        %v256 = vcvt.s32.f32 %v255
        %258 = vrot.lane.b32.xlu0 %v248, 96
        %v259 = vpop.permute.xlu0 %258
        %v261 = vadd.f32 %v248, %v259
        %vm262 = vcmask 523520
        %v263 = vsel %vm262, %v249, -inf
        %264 = vmax.xlane.f32.xlu0 %v263
        %v265 = vpop.xlane.xlu0 %264
        %vm266 = vcmp.gt.f32.partialorder %v265, 0.0
        %v267 = vsel %vm266, 1, 0
        %v268 = vcvt.s32.f32 %v267
        %v269 = vadd.f32 %v256, %v268
        %270 = vrot.lane.b32.xlu0 %v248, 64
        %v271 = vpop.permute.xlu0 %270
        %v273 = vadd.f32 %v261, %v271
        %vm274 = vcmask 785920
        %v275 = vsel %vm274, %v249, -inf
        %276 = vmax.xlane.f32.xlu0 %v275
        %v277 = vpop.xlane.xlu0 %276
        %vm278 = vcmp.gt.f32.partialorder %v277, 0.0
        %v279 = vsel %vm278, 1, 0
        %v280 = vcvt.s32.f32 %v279
        %v281 = vadd.f32 %v269, %v280
        %282 = vrot.lane.b32.xlu0 %v248, 32
        %v283 = vpop.permute.xlu0 %282
        %v285 = vadd.f32 %v273, %v283
        %vm286 = vcmask 1048320
        %v287 = vsel %vm286, %v249, -inf
        %288 = vmax.xlane.f32.xlu0 %v287
        %v289 = vpop.xlane.xlu0 %288
        %vm290 = vcmp.gt.f32.partialorder %v289, 0.0
        %v291 = vsel %vm290, 1, 0
        %v292 = vcvt.s32.f32 %v291
        %v293 = vadd.f32 %v281, %v292
        %v294 = vmax.f32 %v293, 1.0
        %v295 = vrcp.pop %v294
        %v296 = vmul.f32 %v294, %v295
        %v297 = vsub.f32 1.0, %v296
        %v298 = vmul.f32 %v295, %v297
        %v299 = vadd.f32 %v295, %v298
        %vm300 = vweird.f32 %v294
        %vm301 = vweird.f32 %v295
        %vm302 = vmor %vm300, %vm301
        %v303 = vsel %vm302, %v295, %v299
        %v304 = vand.u32 2147483647, %v294
        %vm305 = vcmp.eq.f32.partialorder %v304, 8.507059e+37
        %v306 = vand.u32 %v294, 2147483648
        %v307 = vor.u32 1.1754944e-38, %v306
        %v308 = vsel %vm305, %v307, %v303
        %v309 = vmul.f32 %v285, %v308
        %v310 = vadd.f32 %v247, %v309
        %311 = vst.msk [vmem:[%s227] sm:$0xff] %vm250, %v310
        %v312 = vand.u32 2147483647, %v310
        %v313 = vsel %vm250, %v312, -inf
        %314 = vmax.xlane.f32.xlu0 %v313
        %v315 = vpop.xlane.xlu0 %314
        %vm316 = vcmp.gt.f32.partialorder %v315, 0.0
        %v317 = vsel %vm316, 1, 0
        %v318 = vcvt.s32.f32 %v317
        %vm319 = vcmask 7168
        %320 = vst.msk [vmem:[%s237] sm:$0xff] %vm319, %v318
        %s321 = sand.u32 %s84, 1
        %s322 = scalar_lea.sflag [#allocation4], %s321
        %s323 = sand.u32 %s84, 1
        %s324 = smul.addr %s323, 8
        %s325 = scalar_lea.vmem [#allocation7], %s324
        %p326 = scmp.lt.s32.totalorder %s24, 1
        %s327 = scalar_select %p326, %s24, 1
        %s328 = smul.addr %s327, 8
        %s329 = scalar_lea.vmem %s3, %s328
        // Predicated region
        $region37: #{tpu_custom_call.1} parent=27 // pred_check
          %p330 = pneg %p94
        $region38: #{tpu_custom_call.1} parent=27 // pred_check_branch
          %332 = sbr.rel (%p330) target = $region40
        $region39: #{tpu_custom_call.1} parent=27 // pred_region
          %334 = vsyncadd %s322, 0
          %s335 = smul.addr %s24, 8
          %s336 = scalar_lea.hbm %s2, %s335
          %s338 = sshll.u32 %s325, 4
          %s339 = int_to_ptr.vmem [resolvable:$true] %s338
          %s340 = sshll.u32 %s336, 4
          %s341 = int_to_ptr.hbm [resolvable:$true] %s340
          %343 = dma.vmem_to_hbm [thread:$0]  %s339, 128, %s341, %s322
        $region40: #{tpu_custom_call.1} parent=27 // pred_fallthru
          _
        // Predicated region
        $region41: #{tpu_custom_call.1} parent=27 // pred_check
          %p344 = pneg %p120
        $region42: #{tpu_custom_call.1} parent=27 // pred_check_branch
          %346 = sbr.rel (%p344) target = $region44
        $region43: #{tpu_custom_call.1} parent=27 // pred_region
          _
        $region44: #{tpu_custom_call.1} parent=27 // pred_fallthru
          _
      $region28: #{tpu_custom_call.1} parent=5 // pred_fallthru
        _
      %p347 = scmp.le.s32.totalorder 2, %s19
      // Predicated region
      $region45: #{tpu_custom_call.1} parent=5 // pred_check
        %p348 = pneg %p347
      $region46: #{tpu_custom_call.1} parent=5 // pred_check_branch
        %350 = sbr.rel (%p348) target = $region48
      $region47: #{tpu_custom_call.1} parent=5 // pred_region
        %s351 = ssub.s32 %s19, 2
        // Predicated region
        $region49: #{tpu_custom_call.1} parent=47 // pred_check
          %p352 = pneg %p100
        $region50: #{tpu_custom_call.1} parent=47 // pred_check_branch
          %354 = sbr.rel (%p352) target = $region52
        $region51: #{tpu_custom_call.1} parent=47 // pred_region
          %s355 = sand.u32 %s85, 1
          %s356 = scalar_lea.sflag [#allocation4], %s355
          %s357 = sand.u32 %s85, 1
          %s358 = smul.addr %s357, 8
          %s359 = scalar_lea.vmem [#allocation7], %s358
          %361 = dma.done %s356, 128
        $region52: #{tpu_custom_call.1} parent=47 // pred_fallthru
          _
        // Predicated region
        $region53: #{tpu_custom_call.1} parent=47 // pred_check
          %p362 = pneg %p126
        $region54: #{tpu_custom_call.1} parent=47 // pred_check_branch
          %364 = sbr.rel (%p362) target = $region56
        $region55: #{tpu_custom_call.1} parent=47 // pred_region
          %p365 = scmp.lt.s32.totalorder %s25, 1
          %s366 = scalar_select %p365, %s25, 1
          %s367 = smul.addr %s366, 8
          %s368 = scalar_lea.vmem %s3, %s367
        $region56: #{tpu_custom_call.1} parent=47 // pred_fallthru
          _
      $region48: #{tpu_custom_call.1} parent=5 // pred_fallthru
        _
    $region6: #{tpu_custom_call.1} parent=1 // loop_footer
      %s23 = sadd.s32 1, %s19
    $region7: #{tpu_custom_call.1} parent=1 // loop_footer_branch
      %18 = sbr.rel target = $region3
    $region8: #{tpu_custom_call.1} parent=1 // loop_exit
      _
    %369 = vsyncpa [#allocation3], 1
    %s370 = scalar_lea.sflag [#allocation3], 1
    %371 = vsyncpa %s370, 1
    %372 = vsyncpa [#allocation6], 1
    %s373 = scalar_lea.sflag [#allocation6], 1
    %374 = vsyncpa %s373, 1
    %375 = vsyncpa [#allocation4], 1
    %s376 = scalar_lea.sflag [#allocation4], 1
    %377 = vsyncpa %s376, 1

</llo_original>
